<compile_context>
chip_gen: v7x
topology: tpu7x:2x2x1
jax: 0.10.0
libtpu: 0.0.40
codegen_flags: <defaults>
</compile_context>

<pallas_src>
import functools

import jax
import jax.numpy as jnp
from jax.experimental import pallas as pl
from jax.experimental.pallas import tpu as pltpu


# ----------------------------------------------------------------------------- kernels
def input_projection_kernel(x_ref, wxf_ref, wxb_ref, bf_ref, bb_ref, gxf_ref, gxb_ref):
    """Two dense half-dots per row tile: gx_d = x @ Wx_d + b_d  (d in {fwd, bwd}).

    No structural zeros are pushed through the MXU.  Gate column layout inside each
    4H block is [i | f | o | g].
    """
    x = x_ref[...]
    gxf_ref[...] = (jnp.dot(x, wxf_ref[...], preferred_element_type=jnp.float32)
                    + bf_ref[...]).astype(gxf_ref.dtype)
    gxb_ref[...] = (jnp.dot(x, wxb_ref[...], preferred_element_type=jnp.float32)
                    + bb_ref[...]).astype(gxb_ref.dtype)


def bilstm_recurrence_kernel(gxf_ref, gxb_ref, whhf_ref, whhb_ref, wfc_ref, bfc_ref,
                             out_ref, hf_scr, cf_scr, hb_scr, cb_scr, *, unroll):
    """Bidirectional LSTM recurrence over one (time-chunk, batch-block).

    gxf_ref: (L, Bb, 4H) forward pre-gates for times [t_blk*L, (t_blk+1)*L)
    gxb_ref: (L, Bb, 4H) backward pre-gates for the mirrored time window
             (the reversed time index is handled by the BlockSpec index_map; within the
              chunk we read it back-to-front).
    h*/c* scratch: (Bb, H) f32 state per direction, carried across time chunks.
    """
    t_blk = pl.program_id(1)
    L = gxf_ref.shape[0]
    H = hf_scr.shape[1]

    @pl.when(t_blk == 0)
    def _init():
        hf_scr[...] = jnp.zeros_like(hf_scr)
        cf_scr[...] = jnp.zeros_like(cf_scr)
        hb_scr[...] = jnp.zeros_like(hb_scr)
        cb_scr[...] = jnp.zeros_like(cb_scr)

    whh_f = whhf_ref[...]
    whh_b = whhb_ref[...]
    wdt = whh_f.dtype

    def sigmoid(x):
        # one EUP tanh instead of exp + reciprocal
        return 0.5 * (jnp.tanh(0.5 * x) + 1.0)

    def cell(gates, c):
        # gate columns inside the 4H block: [i | f | o | g]
        sg = sigmoid(gates[:, :3 * H])
        gg = jnp.tanh(gates[:, 3 * H:])
        c = sg[:, H:2 * H] * c + sg[:, :H] * gg
        h = sg[:, 2 * H:3 * H] * jnp.tanh(c)
        return h, c

    def step(s, carry):
        h_f, c_f, h_b, c_b = carry
        # two dense recurrent dots per step (independent -> back-to-back MXU pushes)
        rec_f = jnp.dot(h_f.astype(wdt), whh_f, preferred_element_type=jnp.float32)
        rec_b = jnp.dot(h_b.astype(wdt), whh_b, preferred_element_type=jnp.float32)
        h_f, c_f = cell(gxf_ref[s].astype(jnp.float32) + rec_f, c_f)
        h_b, c_b = cell(gxb_ref[L - 1 - s].astype(jnp.float32) + rec_b, c_b)
        return h_f, c_f, h_b, c_b

    h_f, c_f, h_b, c_b = jax.lax.fori_loop(
        0, L, step,
        (hf_scr[...], cf_scr[...], hb_scr[...], cb_scr[...]),
        unroll=unroll)

    hf_scr[...] = h_f
    cf_scr[...] = c_f
    hb_scr[...] = h_b
    cb_scr[...] = c_b

    @pl.when(t_blk == pl.num_programs(1) - 1)
    def _final():
        hcat = jnp.concatenate([h_f, h_b], axis=1).astype(wfc_ref.dtype)
        logits = (jnp.dot(hcat, wfc_ref[...], preferred_element_type=jnp.float32)
                  + bfc_ref[...])
        out_ref[...] = logits.astype(out_ref.dtype)


# ----------------------------------------------------------------------------- tiling helpers
def _vmem_capacity_bytes():
    try:
        cap = getattr(pltpu.get_tpu_info(), "vmem_capacity_bytes", None)
        if cap:
            return int(cap)
    except Exception:
        pass
    return 64 * 2 ** 20          # conservative fallback: v7x per-TensorCore VMEM


def _pick_rows(R, E, H4, in_bytes, gx_bytes, budget):
    """Largest multiple-of-8 divisor of R whose working set fits the VMEM budget.
    Constant-index weights are conservatively counted twice (double-buffered)."""
    fixed = 2 * (2 * E * H4 * in_bytes + 2 * H4 * 4)
    def ws(rb):
        return fixed + 2 * rb * E * in_bytes + 2 * 2 * rb * H4 * gx_bytes
    best = None
    d = 8
    while d <= min(R, 8192):
        if R % d == 0 and ws(d) <= budget:
            best = d
        d += 8
    return best if best is not None else R


def _pick_batch_block(B):
    """Batch tile: multiple of 8 when possible; prefer >=2 blocks so megacore has work."""
    cands = [d for d in range(8, B + 1, 8) if B % d == 0]
    if not cands:
        return B
    multi = [d for d in cands if B // d >= 2]
    return max(multi) if multi else max(cands)


def _pick_chunk(T, Bb, H, H4, C, gx_bytes, w_bytes, budget):
    """Largest divisor of T whose kernel-2 working set fits the VMEM budget."""
    fixed = (2 * (2 * H * H4 + 2 * H * C) * w_bytes + C * 4      # weights (x2 buffers) + bias
             + 4 * Bb * H * 4 + 2 * Bb * C * 4)                  # h/c scratch + out buffers
    def ws(L):
        return fixed + 2 * 2 * L * Bb * H4 * gx_bytes            # gx_f + gx_b double-buffered
    best = 1
    for L in range(1, T + 1):
        if T % L == 0 and ws(L) <= budget:
            best = L
    return best


# ----------------------------------------------------------------------------- param packing
def _gate_permute(w, H):
    """PyTorch (4H, in) with gate row-blocks [i, f, g, o] -> (in, 4H) with columns [i, f, o, g]."""
    wt = w.T
    return jnp.concatenate([wt[:, 0 * H:1 * H], wt[:, 1 * H:2 * H],
                            wt[:, 3 * H:4 * H], wt[:, 2 * H:3 * H]], axis=1)


def pack_kernel_params(raw, hidden_dim):
    """Dense per-direction weights in the kernels' gate-column layout (no zero padding)."""
    H = hidden_dim
    return {
        "wx_f": _gate_permute(raw["w_ih_f"], H),            # (E, 4H)
        "wx_b": _gate_permute(raw["w_ih_b"], H),            # (E, 4H)
        "whh_f": _gate_permute(raw["w_hh_f"], H),           # (H, 4H)
        "whh_b": _gate_permute(raw["w_hh_b"], H),           # (H, 4H)
        "b_f": _gate_permute(raw["b_f"][:, None], H),       # (1, 4H)  = b_ih + b_hh (fwd)
        "b_b": _gate_permute(raw["b_b"][:, None], H),       # (1, 4H)  = b_ih + b_hh (bwd)
        "wfc": raw["w_fc"].T,                                # (2H, C)
        "bfc": raw["b_fc"].reshape(1, -1),                   # (1, C)
    }


# ----------------------------------------------------------------------------- forward
def lstm_classifier_forward(tokens, emb_table, kp, *,
                            matmul_dtype=jnp.bfloat16, unroll=4):
    """tokens: (B, T) int32.  Returns logits (B, num_classes) in f32."""
    B, T = tokens.shape
    E = emb_table.shape[1]
    H4 = kp["wx_f"].shape[1]
    H = H4 // 4
    C = kp["wfc"].shape[1]

    mdt = jnp.dtype(matmul_dtype)
    in_bytes = mdt.itemsize
    gx_dtype = mdt                      # bf16 gx halves the inter-kernel HBM round trip
    gx_bytes = jnp.dtype(gx_dtype).itemsize

    cap = _vmem_capacity_bytes()
    budget = int(0.45 * cap)            # tile-selection budget (per-generation)
    vmem_limit = int(0.60 * cap)        # scoped limit requested from the compiler

    # ---- XLA glue: ONE time-major embedding gather, shared by both directions ----
    # TODO(synk): gather could move in-kernel via scalar-prefetched token ids + DMA.
    x = jnp.take(emb_table, tokens.T, axis=0)                  # (T, B, E)
    x2 = x.reshape(T * B, E).astype(mdt)

    wx_f = kp["wx_f"].astype(mdt)
    wx_b = kp["wx_b"].astype(mdt)
    whh_f = kp["whh_f"].astype(mdt)
    whh_b = kp["whh_b"].astype(mdt)
    wfc = kp["wfc"].astype(mdt)
    b_f, b_b, bfc = kp["b_f"], kp["b_b"], kp["bfc"]            # f32 biases

    # ---- kernel 1: hoisted input projection (parallel over row tiles) ----
    R = T * B
    Rb = _pick_rows(R, E, H4, in_bytes, gx_bytes, budget)
    gx_f2, gx_b2 = pl.pallas_call(
        input_projection_kernel,
        out_shape=(jax.ShapeDtypeStruct((R, H4), gx_dtype),
                   jax.ShapeDtypeStruct((R, H4), gx_dtype)),
        grid=(R // Rb,),
        in_specs=[pl.BlockSpec((Rb, E), lambda i: (i, 0)),
                  pl.BlockSpec((E, H4), lambda i: (0, 0)),
                  pl.BlockSpec((E, H4), lambda i: (0, 0)),
                  pl.BlockSpec((1, H4), lambda i: (0, 0)),
                  pl.BlockSpec((1, H4), lambda i: (0, 0))],
        out_specs=(pl.BlockSpec((Rb, H4), lambda i: (i, 0)),
                   pl.BlockSpec((Rb, H4), lambda i: (i, 0))),
        compiler_params=pltpu.CompilerParams(
            dimension_semantics=("parallel",),
            vmem_limit_bytes=vmem_limit),
        cost_estimate=pl.CostEstimate(
            flops=2 * R * E * 2 * H4, transcendentals=0,
            bytes_accessed=R * E * in_bytes + 2 * E * H4 * in_bytes
                           + 2 * R * H4 * gx_bytes),
    )(x2, wx_f, wx_b, b_f, b_b)

    gx_f = gx_f2.reshape(T, B, H4)      # metadata-only reshapes (row index = t*B + b)
    gx_b = gx_b2.reshape(T, B, H4)

    # ---- kernel 2: serial bidirectional recurrence, batch-parallel grid ----
    Bb = _pick_batch_block(B)
    nb = B // Bb
    chunk = _pick_chunk(T, Bb, H, H4, C, gx_bytes, in_bytes, budget)
    n_t = T // chunk

    kernel2 = functools.partial(bilstm_recurrence_kernel, unroll=unroll)
    logits = pl.pallas_call(
        kernel2,
        out_shape=jax.ShapeDtypeStruct((B, C), jnp.float32),
        grid=(nb, n_t),                                        # (batch blocks, time chunks)
        in_specs=[pl.BlockSpec((chunk, Bb, H4), lambda b, t: (t, b, 0)),
                  # backward pre-gates: mirrored time-chunk, read from the other end
                  pl.BlockSpec((chunk, Bb, H4), lambda b, t: (n_t - 1 - t, b, 0)),
                  pl.BlockSpec((H, H4), lambda b, t: (0, 0)),
                  pl.BlockSpec((H, H4), lambda b, t: (0, 0)),
                  pl.BlockSpec((2 * H, C), lambda b, t: (0, 0)),
                  pl.BlockSpec((1, C), lambda b, t: (0, 0))],
        out_specs=pl.BlockSpec((Bb, C), lambda b, t: (b, 0)),
        scratch_shapes=[pltpu.VMEM((Bb, H), jnp.float32)] * 4,  # h_f, c_f, h_b, c_b
        compiler_params=pltpu.CompilerParams(
            dimension_semantics=("parallel", "arbitrary"),
            vmem_limit_bytes=vmem_limit),
        cost_estimate=pl.CostEstimate(
            flops=2 * T * B * H * 2 * H4 + 2 * B * 2 * H * C,
            transcendentals=T * B * 10 * H,
            bytes_accessed=2 * T * B * H4 * gx_bytes
                           + (2 * H * H4 + 2 * H * C) * in_bytes + B * C * 4),
    )(gx_f, gx_b, whh_f, whh_b, wfc, bfc)
    return logits


# ----------------------------------------------------------------------------- params / reference
def init_raw_params(key, vocab_size, embed_dim, hidden_dim, num_classes):
    ks = jax.random.split(key, 12)
    H, E, C = hidden_dim, embed_dim, num_classes
    s = 0.1

    def w(k, shape):
        return s * jax.random.normal(k, shape, jnp.float32)

    emb = w(ks[0], (vocab_size, E)).at[0].set(0.0)             # padding_idx=0
    return {
        "embedding": emb,
        "w_ih_f": w(ks[1], (4 * H, E)), "w_hh_f": w(ks[2], (4 * H, H)),
        "b_f": w(ks[3], (4 * H,)) + w(ks[4], (4 * H,)),        # b_ih + b_hh
        "w_ih_b": w(ks[5], (4 * H, E)), "w_hh_b": w(ks[6], (4 * H, H)),
        "b_b": w(ks[7], (4 * H,)) + w(ks[8], (4 * H,)),
        "w_fc": w(ks[9], (C, 2 * H)), "b_fc": w(ks[10], (C,)),
    }


def reference_forward(tokens, raw):
    """Pure-JAX mirror of nn.Embedding + nn.LSTM(bidirectional) + nn.Linear (PyTorch layout)."""
    x = jnp.take(raw["embedding"], tokens, axis=0)             # (B, T, E)
    H = raw["w_hh_f"].shape[1]

    def run(x_seq, w_ih, w_hh, b):
        wih_t, whh_t = w_ih.T, w_hh.T

        def cell(carry, x_t):
            h, c = carry
            gates = x_t @ wih_t + h @ whh_t + b
            i = jax.nn.sigmoid(gates[:, 0 * H:1 * H])
            f = jax.nn.sigmoid(gates[:, 1 * H:2 * H])
            g = jnp.tanh(gates[:, 2 * H:3 * H])
            o = jax.nn.sigmoid(gates[:, 3 * H:4 * H])
            c = f * c + i * g
            h = o * jnp.tanh(c)
            return (h, c), None

        z = jnp.zeros((x_seq.shape[1], H), jnp.float32)
        (h, _), _ = jax.lax.scan(cell, (z, z), x_seq)
        return h

    xt = jnp.transpose(x, (1, 0, 2))                           # (T, B, E)
    h_f = run(xt, raw["w_ih_f"], raw["w_hh_f"], raw["b_f"])
    h_b = run(xt[::-1], raw["w_ih_b"], raw["w_hh_b"], raw["b_b"])
    hcat = jnp.concatenate([h_f, h_b], axis=1)                 # = cat(hn[0], hn[1])
    return hcat @ raw["w_fc"].T + raw["b_fc"]


if __name__ == "__main__":
    vocab_size, embed_dim, hidden_dim, num_classes = 50, 16, 32, 4
    B, T = 2, 8

    key = jax.random.PRNGKey(0)
    k_params, k_tok = jax.random.split(key)
    raw = init_raw_params(k_params, vocab_size, embed_dim, hidden_dim, num_classes)
    tokens = jax.random.randint(k_tok, (B, T), 0, vocab_size, dtype=jnp.int32)

    kp = pack_kernel_params(raw, hidden_dim)
    ref = jax.block_until_ready(reference_forward(tokens, raw))

    # f32 path: tight correctness check of the kernel math.
    logits_f32 = jax.block_until_ready(
        lstm_classifier_forward(tokens, raw["embedding"], kp, matmul_dtype=jnp.float32))
    assert logits_f32.shape == (B, num_classes)
    assert jnp.allclose(logits_f32, ref, atol=1e-4, rtol=1e-4), (logits_f32, ref)

    # bf16 path (performance default): looser tolerance due to bf16 weights/gx.
    logits_bf16 = jax.block_until_ready(
        lstm_classifier_forward(tokens, raw["embedding"], kp, matmul_dtype=jnp.bfloat16))
    assert logits_bf16.shape == (B, num_classes)
    assert jnp.allclose(logits_bf16, ref, atol=3e-2, rtol=3e-2), (logits_bf16, ref)

    print("KERNEL_OK")
</pallas_src>

<mosaic_0001>
module attributes {stable_mosaic.version = 11 : i64} {
  func.func @input_projection_kernel(%arg0: i32, %arg1: memref<16x16xf32, #tpu.memory_space<vmem>>, %arg2: memref<16x128xf32, #tpu.memory_space<vmem>>, %arg3: memref<16x128xf32, #tpu.memory_space<vmem>>, %arg4: memref<1x128xf32, #tpu.memory_space<vmem>>, %arg5: memref<1x128xf32, #tpu.memory_space<vmem>>, %arg6: memref<16x128xf32, #tpu.memory_space<vmem>>, %arg7: memref<16x128xf32, #tpu.memory_space<vmem>>) attributes {dimension_semantics = [#tpu.dimension_semantics<parallel>], iteration_bounds = array<i64: 1>, scalar_prefetch = 0 : i64, scratch_operands = 0 : i64, tpu.core_type = #tpu.core_type<tc>, window_params = [{transform_indices = @transform_0, window_bounds = array<i64: 16, 16>}, {pipeline_mode = #tpu.pipeline_mode<synchronous>, transform_indices = @transform_1, window_bounds = array<i64: 16, 128>}, {pipeline_mode = #tpu.pipeline_mode<synchronous>, transform_indices = @transform_2, window_bounds = array<i64: 16, 128>}, {pipeline_mode = #tpu.pipeline_mode<synchronous>, transform_indices = @transform_3, window_bounds = array<i64: 1, 128>}, {pipeline_mode = #tpu.pipeline_mode<synchronous>, transform_indices = @transform_4, window_bounds = array<i64: 1, 128>}, {transform_indices = @transform_5, window_bounds = array<i64: 16, 128>}, {transform_indices = @transform_6, window_bounds = array<i64: 16, 128>}]} {
    %c0 = arith.constant 0 : index
    %c0_0 = arith.constant 0 : index
    %0 = vector.load %arg1[%c0, %c0_0] : memref<16x16xf32, #tpu.memory_space<vmem>>, vector<16x16xf32>
    %c0_1 = arith.constant 0 : index
    %c0_2 = arith.constant 0 : index
    %1 = vector.load %arg2[%c0_1, %c0_2] : memref<16x128xf32, #tpu.memory_space<vmem>>, vector<16x128xf32>
    %cst = arith.constant dense<0.000000e+00> : vector<16x128xf32>
    %2 = tpu.matmul %0, %1, %cst {dimension_numbers = #tpu.dot_dimension_numbers<[1], [0], [0], [1], [0, 0, 1, 1], [], []>} : vector<16x16xf32>, vector<16x128xf32>, vector<16x128xf32> -> vector<16x128xf32>
    %c0_3 = arith.constant 0 : index
    %c0_4 = arith.constant 0 : index
    %3 = vector.load %arg4[%c0_3, %c0_4] : memref<1x128xf32, #tpu.memory_space<vmem>>, vector<1x128xf32>
    %4 = vector.broadcast %3 : vector<1x128xf32> to vector<16x128xf32>
    %5 = arith.addf %2, %4 : vector<16x128xf32>
    %c0_5 = arith.constant 0 : index
    %c0_6 = arith.constant 0 : index
    %6 = vector.load %arg6[%c0_5, %c0_6] : memref<16x128xf32, #tpu.memory_space<vmem>>, vector<16x128xf32>
    tpu.vector_store %arg6[%c0_5, %c0_6], %5 {strides = array<i32>} : memref<16x128xf32, #tpu.memory_space<vmem>>, vector<16x128xf32>,
    %c0_7 = arith.constant 0 : index
    %c0_8 = arith.constant 0 : index
    %7 = vector.load %arg3[%c0_7, %c0_8] : memref<16x128xf32, #tpu.memory_space<vmem>>, vector<16x128xf32>
    %cst_9 = arith.constant dense<0.000000e+00> : vector<16x128xf32>
    %8 = tpu.matmul %0, %7, %cst_9 {dimension_numbers = #tpu.dot_dimension_numbers<[1], [0], [0], [1], [0, 0, 1, 1], [], []>} : vector<16x16xf32>, vector<16x128xf32>, vector<16x128xf32> -> vector<16x128xf32>
    %c0_10 = arith.constant 0 : index
    %c0_11 = arith.constant 0 : index
    %9 = vector.load %arg5[%c0_10, %c0_11] : memref<1x128xf32, #tpu.memory_space<vmem>>, vector<1x128xf32>
    %10 = vector.broadcast %9 : vector<1x128xf32> to vector<16x128xf32>
    %11 = arith.addf %8, %10 : vector<16x128xf32>
    %c0_12 = arith.constant 0 : index
    %c0_13 = arith.constant 0 : index
    %12 = vector.load %arg7[%c0_12, %c0_13] : memref<16x128xf32, #tpu.memory_space<vmem>>, vector<16x128xf32>
    tpu.vector_store %arg7[%c0_12, %c0_13], %11 {strides = array<i32>} : memref<16x128xf32, #tpu.memory_space<vmem>>, vector<16x128xf32>,
    return
  }
  func.func @transform_0(%arg0: i32) -> (i32, i32) {
    %c0_i32 = arith.constant 0 : i32
    %c0_i32_0 = arith.constant 0 : i32
    return %arg0, %c0_i32 : i32, i32
  }
  func.func @transform_1(%arg0: i32) -> (i32, i32) {
    %c0_i32 = arith.constant 0 : i32
    %c0_i32_0 = arith.constant 0 : i32
    %c0_i32_1 = arith.constant 0 : i32
    return %c0_i32, %c0_i32_0 : i32, i32
  }
  func.func @transform_2(%arg0: i32) -> (i32, i32) {
    %c0_i32 = arith.constant 0 : i32
    %c0_i32_0 = arith.constant 0 : i32
    %c0_i32_1 = arith.constant 0 : i32
    return %c0_i32, %c0_i32_0 : i32, i32
  }
  func.func @transform_3(%arg0: i32) -> (i32, i32) {
    %c0_i32 = arith.constant 0 : i32
    %c0_i32_0 = arith.constant 0 : i32
    %c0_i32_1 = arith.constant 0 : i32
    return %c0_i32, %c0_i32_0 : i32, i32
  }
  func.func @transform_4(%arg0: i32) -> (i32, i32) {
    %c0_i32 = arith.constant 0 : i32
    %c0_i32_0 = arith.constant 0 : i32
    %c0_i32_1 = arith.constant 0 : i32
    return %c0_i32, %c0_i32_0 : i32, i32
  }
  func.func @transform_5(%arg0: i32) -> (i32, i32) {
    %c0_i32 = arith.constant 0 : i32
    %c0_i32_0 = arith.constant 0 : i32
    return %arg0, %c0_i32 : i32, i32
  }
  func.func @transform_6(%arg0: i32) -> (i32, i32) {
    %c0_i32 = arith.constant 0 : i32
    %c0_i32_0 = arith.constant 0 : i32
    return %arg0, %c0_i32 : i32, i32
  }
}

</mosaic_0001>

<llo_original>
// kernel: tpu_custom_call.1
$region0: #{tpu_custom_call.1}
  #allocation0 [shape = 'u32[]', space=smem, size = 0x4, offset = 0x4, fixed_abs, tag = 'smem constant byte address 0x4 - core index']
  #allocation1 [shape = 'u32[144,128]{1,0:T(1,128)}', space=vmem, size = 0x12000, scoped, tag = 'internal scratch']
  %s0 = inlined_call_operand.hbm [shape: f32[16,16], index: 0, kind: input, shape index: {}]
  %s1 = inlined_call_operand.hbm [shape: f32[16,128], index: 1, kind: input, shape index: {}]
  %s2 = inlined_call_operand.hbm [shape: f32[16,128], index: 2, kind: input, shape index: {}]
  %s3 = inlined_call_operand.vmem [shape: f32[1,128], index: 3, kind: input, shape index: {}]
  %s4 = inlined_call_operand.vmem [shape: f32[1,128], index: 4, kind: input, shape index: {}]
  %s5 = inlined_call_operand.hbm [shape: f32[16,128], index: 5, kind: output, shape index: {0}]
  %s6 = inlined_call_operand.hbm [shape: f32[16,128], index: 6, kind: output, shape index: {1}]
  %7 = xla_tuple %s5, %s6
  %s8 = sld [smem:[#allocation0]]
  $region50: #{tpu_custom_call.1} parent=0
    _
  %s10 = ssub.s32 1, %s8
  %s11 = scalar_select 0, %s10, %s8
  $region1: #{tpu_custom_call.1} parent=0
    #allocation2 [shape = 'u8[8192]{0}', space=vmem, size = 0x2000, scoped, tag = 'input window, operand 0, single buffered']
    #allocation3 [shape = 's32[1]{0}', space=sflag, size = 0x4, scoped, tag = 'scoped memory for tpu_custom_call.1']
    #allocation4 [shape = 's32[1]{0}', space=sflag, size = 0x4, scoped, tag = 'scoped memory for tpu_custom_call.1']
    #allocation5 [shape = 'u8[8192]{0}', space=vmem, size = 0x2000, scoped, tag = 'input window, operand 1, single buffered']
    #allocation6 [shape = 's32[1]{0}', space=sflag, size = 0x4, scoped, tag = 'scoped memory for tpu_custom_call.1']
    #allocation7 [shape = 'u8[8192]{0}', space=vmem, size = 0x2000, scoped, tag = 'input window, operand 2, single buffered']
    #allocation8 [shape = 'u8[8192]{0}', space=vmem, size = 0x2000, scoped, tag = 'output window, operand 0, single buffered']
    #allocation9 [shape = 'u8[8192]{0}', space=vmem, size = 0x2000, scoped, tag = 'output window, operand 1, single buffered']
    #allocation10 [shape = 's32[1]{0}', space=sflag, size = 0x4, scoped, tag = 'scoped memory for tpu_custom_call.1']
    %12 = vsyncpa [#allocation3], 0
    %13 = vsyncpa [#allocation6], 0
    %14 = vsyncpa [#allocation4], 0
    %15 = vsyncpa [#allocation10], 0
    // Predicated region
    $region2: #{tpu_custom_call.1} parent=1 // pred_check
      _
    $region3: #{tpu_custom_call.1} parent=1 // pred_check_branch
      %17 = sbr.rel (0) target = $region5
    $region4: #{tpu_custom_call.1} parent=1 // pred_region
      %s19 = ssub.s32 256, 256
      %20 = vsyncadd [#allocation3], %s19
      %s21 = sshll.u32 [#allocation2], 4
      %s22 = int_to_ptr.vmem [resolvable:$true] %s21
      %27 = dma.hbm_to_vmem [thread:$0]  %s0, 256, %s22, [#allocation3], 128, 128, 8
    $region5: #{tpu_custom_call.1} parent=1 // pred_fallthru
      _
    // Predicated region
    $region6: #{tpu_custom_call.1} parent=1 // pred_check
      _
    $region7: #{tpu_custom_call.1} parent=1 // pred_check_branch
      %29 = sbr.rel (0) target = $region9
    $region8: #{tpu_custom_call.1} parent=1 // pred_region
      %s31 = ssub.s32 256, 256
      %32 = vsyncadd [#allocation6], %s31
      %s33 = sshll.u32 [#allocation5], 4
      %s34 = int_to_ptr.vmem [resolvable:$true] %s33
      %39 = dma.hbm_to_vmem [thread:$0]  %s1, 256, %s34, [#allocation6], 128, 128, 8
    $region9: #{tpu_custom_call.1} parent=1 // pred_fallthru
      _
    // Predicated region
    $region10: #{tpu_custom_call.1} parent=1 // pred_check
      _
    $region11: #{tpu_custom_call.1} parent=1 // pred_check_branch
      %41 = sbr.rel (0) target = $region13
    $region12: #{tpu_custom_call.1} parent=1 // pred_region
      %s43 = ssub.s32 256, 256
      %44 = vsyncadd [#allocation6], %s43
      %s45 = sshll.u32 [#allocation7], 4
      %s46 = int_to_ptr.vmem [resolvable:$true] %s45
      %51 = dma.hbm_to_vmem [thread:$0]  %s2, 256, %s46, [#allocation6], 128, 128, 8
    $region13: #{tpu_custom_call.1} parent=1 // pred_fallthru
      _
    // Predicated region
    $region14: #{tpu_custom_call.1} parent=1 // pred_check
      _
    $region15: #{tpu_custom_call.1} parent=1 // pred_check_branch
      %53 = sbr.rel (0) target = $region17
    $region16: #{tpu_custom_call.1} parent=1 // pred_region
      _
    $region17: #{tpu_custom_call.1} parent=1 // pred_fallthru
      _
    // Predicated region
    $region18: #{tpu_custom_call.1} parent=1 // pred_check
      _
    $region19: #{tpu_custom_call.1} parent=1 // pred_check_branch
      %55 = sbr.rel (0) target = $region21
    $region20: #{tpu_custom_call.1} parent=1 // pred_region
      _
    $region21: #{tpu_custom_call.1} parent=1 // pred_fallthru
      _
    // Predicated region
    $region22: #{tpu_custom_call.1} parent=1 // pred_check
      _
    $region23: #{tpu_custom_call.1} parent=1 // pred_check_branch
      %57 = sbr.rel (0) target = $region25
    $region24: #{tpu_custom_call.1} parent=1 // pred_region
      %58 = dma.done [#allocation3], 256
    $region25: #{tpu_custom_call.1} parent=1 // pred_fallthru
      _
    // Predicated region
    $region26: #{tpu_custom_call.1} parent=1 // pred_check
      _
    $region27: #{tpu_custom_call.1} parent=1 // pred_check_branch
      %60 = sbr.rel (0) target = $region29
    $region28: #{tpu_custom_call.1} parent=1 // pred_region
      %61 = dma.done [#allocation6], 256
    $region29: #{tpu_custom_call.1} parent=1 // pred_fallthru
      _
    // Predicated region
    $region30: #{tpu_custom_call.1} parent=1 // pred_check
      _
    $region31: #{tpu_custom_call.1} parent=1 // pred_check_branch
      %63 = sbr.rel (0) target = $region33
    $region32: #{tpu_custom_call.1} parent=1 // pred_region
      %64 = dma.done [#allocation6], 256
    $region33: #{tpu_custom_call.1} parent=1 // pred_fallthru
      _
    %v65 = vld [vmem:[#allocation2] sm:$0xff]
    %v66 = vld [vmem:[#allocation2 + $0x8] sm:$0xff]
    %v67 = vld [vmem:[#allocation5] sm:$0xff]
    %v68 = vld [vmem:[#allocation5 + $0x8] sm:$0xff]
    %v69 = vld [vmem:[%s3] sm:$0x1]
    %v71 = vlaneseq
    %v72 = vshrl.u32 %v71, 7
    %v73 = vsub.s32 0, %v72
    %v74 = vrot.slane %v69, %v73
    %vm76 = vcmask 130048
    %v78 = vsel %vm76, %v65, 0
    %v81 = vsel %vm76, %v66, 0
    %83 = vmatprep.subr.mxu0 0.0
    %84 = vmatpush1.msra.mxu0 %v67
    %85 = vmatprep.subr.mxu0 0.0
    %86 = vmatpush1.msra.mxu0 %v68
    %87 = vmatprep.subr.mxu0 0.0
    %88 = vmatpush1.msra.mxu0 0.0
    %89 = vmatprep.subr.mxu0 0.0
    %90 = vmatpush1.msra.mxu0 0.0
    %91 = vmatprep.subr.mxu0 0.0
    %92 = vmatpush1.msra.mxu0 0.0
    %93 = vmatprep.subr.mxu0 0.0
    %94 = vmatpush1.msra.mxu0 0.0
    %95 = vmatprep.subr.mxu0 0.0
    %96 = vmatpush1.msra.mxu0 0.0
    %97 = vmatprep.subr.mxu0 0.0
    %98 = vmatpush1.msra.mxu0 0.0
    %99 = vmatprep.subr.mxu0 0.0
    %100 = vmatpush1.msra.mxu0 0.0
    %101 = vmatprep.subr.mxu0 0.0
    %102 = vmatpush1.msra.mxu0 0.0
    %103 = vmatprep.subr.mxu0 0.0
    %104 = vmatpush1.msra.mxu0 0.0
    %105 = vmatprep.subr.mxu0 0.0
    %106 = vmatpush1.msra.mxu0 0.0
    %107 = vmatprep.subr.mxu0 0.0
    %108 = vmatpush1.msra.mxu0 0.0
    %109 = vmatprep.subr.mxu0 0.0
    %110 = vmatpush1.msra.mxu0 0.0
    %111 = vmatprep.subr.mxu0 0.0
    %112 = vmatpush1.msra.mxu0 0.0
    %113 = vmatprep.subr.mxu0 0.0
    %114 = vmatpush1.msra.mxu0 0.0
    %115 = vmatprep.subr.mxu0 0.0
    %116 = vmatpush1.msra.mxu0 0.0
    %117 = vmatprep.subr.mxu0 0.0
    %118 = vmatpush1.msra.mxu0 0.0
    %119 = vmatprep.subr.mxu0 0.0
    %120 = vmatpush1.msra.mxu0 0.0
    %121 = vmatprep.subr.mxu0 0.0
    %122 = vmatpush1.msra.mxu0 0.0
    %123 = vmatprep.subr.mxu0 0.0
    %124 = vmatpush1.msra.mxu0 0.0
    %125 = vmatprep.subr.mxu0 0.0
    %126 = vmatpush1.msra.mxu0 0.0
    %127 = vmatprep.subr.mxu0 0.0
    %128 = vmatpush1.msra.mxu0 0.0
    %129 = vmatprep.subr.mxu0 0.0
    %130 = vmatpush1.msra.mxu0 0.0
    %131 = vmatprep.subr.mxu0 0.0
    %132 = vmatpush1.msra.mxu0 0.0
    %133 = vmatprep.subr.mxu0 0.0
    %134 = vmatpush1.msra.mxu0 0.0
    %135 = vmatprep.subr.mxu0 0.0
    %136 = vmatpush1.msra.mxu0 0.0
    %137 = vmatprep.subr.mxu0 0.0
    %138 = vmatpush1.msra.mxu0 0.0
    %139 = vmatprep.subr.mxu0 0.0
    %140 = vmatpush1.msra.mxu0 0.0
    %141 = vmatprep.subr.mxu0 0.0
    %142 = vmatpush1.msra.mxu0 0.0
    %143 = vmatprep.subr.mxu0 0.0
    %144 = vmatpush1.msra.mxu0 0.0
    %145 = vmatprep.subr.mxu0 0.0
    %146 = vmatpush1.msra.mxu0 0.0
    %147 = vmatprep.mubr.f32.mxu0 0.0
    %148 = vmatmul.mubr.f32.gmra.mrb[0].mxu0 %v78
    %v149 = vpop.f32.mrb[0].mxu0
    %v150 = vadd.f32 %v74, %v149
    %v151 = vpop.f32.mrb[0].mxu0
    %152 = vmatprep.mubr.f32.mxu0 0.0
    %153 = vmatmul.mubr.f32.gmra.mrb[0].mxu0 %v81
    %v154 = vpop.f32.mrb[0].mxu0
    %v155 = vadd.f32 %v74, %v154
    %v156 = vpop.f32.mrb[0].mxu0
    %157 = vdwg.mxu0
    %158 = vst [vmem:[#allocation8] sm:$0xff] %v150
    %159 = vst [vmem:[#allocation8 + $0x8] sm:$0xff] %v155
    %v160 = vld [vmem:[#allocation7] sm:$0xff]
    %v161 = vld [vmem:[#allocation7 + $0x8] sm:$0xff]
    %v162 = vld [vmem:[%s4] sm:$0x1]
    %v164 = vlaneseq
    %v165 = vshrl.u32 %v164, 7
    %v166 = vsub.s32 0, %v165
    %v167 = vrot.slane %v162, %v166
    %169 = vmatprep.subr.mxu0 0.0
    %170 = vmatpush1.msra.mxu0 %v160
    %171 = vmatprep.subr.mxu0 0.0
    %172 = vmatpush1.msra.mxu0 %v161
    %173 = vmatprep.subr.mxu0 0.0
    %174 = vmatpush1.msra.mxu0 0.0
    %175 = vmatprep.subr.mxu0 0.0
    %176 = vmatpush1.msra.mxu0 0.0
    %177 = vmatprep.subr.mxu0 0.0
    %178 = vmatpush1.msra.mxu0 0.0
    %179 = vmatprep.subr.mxu0 0.0
    %180 = vmatpush1.msra.mxu0 0.0
    %181 = vmatprep.subr.mxu0 0.0
    %182 = vmatpush1.msra.mxu0 0.0
    %183 = vmatprep.subr.mxu0 0.0
    %184 = vmatpush1.msra.mxu0 0.0
    %185 = vmatprep.subr.mxu0 0.0
    %186 = vmatpush1.msra.mxu0 0.0
    %187 = vmatprep.subr.mxu0 0.0
    %188 = vmatpush1.msra.mxu0 0.0
    %189 = vmatprep.subr.mxu0 0.0
    %190 = vmatpush1.msra.mxu0 0.0
    %191 = vmatprep.subr.mxu0 0.0
    %192 = vmatpush1.msra.mxu0 0.0
    %193 = vmatprep.subr.mxu0 0.0
    %194 = vmatpush1.msra.mxu0 0.0
    %195 = vmatprep.subr.mxu0 0.0
    %196 = vmatpush1.msra.mxu0 0.0
    %197 = vmatprep.subr.mxu0 0.0
    %198 = vmatpush1.msra.mxu0 0.0
    %199 = vmatprep.subr.mxu0 0.0
    %200 = vmatpush1.msra.mxu0 0.0
    %201 = vmatprep.subr.mxu0 0.0
    %202 = vmatpush1.msra.mxu0 0.0
    %203 = vmatprep.subr.mxu0 0.0
    %204 = vmatpush1.msra.mxu0 0.0
    %205 = vmatprep.subr.mxu0 0.0
    %206 = vmatpush1.msra.mxu0 0.0
    %207 = vmatprep.subr.mxu0 0.0
    %208 = vmatpush1.msra.mxu0 0.0
    %209 = vmatprep.subr.mxu0 0.0
    %210 = vmatpush1.msra.mxu0 0.0
    %211 = vmatprep.subr.mxu0 0.0
    %212 = vmatpush1.msra.mxu0 0.0
    %213 = vmatprep.subr.mxu0 0.0
    %214 = vmatpush1.msra.mxu0 0.0
    %215 = vmatprep.subr.mxu0 0.0
    %216 = vmatpush1.msra.mxu0 0.0
    %217 = vmatprep.subr.mxu0 0.0
    %218 = vmatpush1.msra.mxu0 0.0
    %219 = vmatprep.subr.mxu0 0.0
    %220 = vmatpush1.msra.mxu0 0.0
    %221 = vmatprep.subr.mxu0 0.0
    %222 = vmatpush1.msra.mxu0 0.0
    %223 = vmatprep.subr.mxu0 0.0
    %224 = vmatpush1.msra.mxu0 0.0
    %225 = vmatprep.subr.mxu0 0.0
    %226 = vmatpush1.msra.mxu0 0.0
    %227 = vmatprep.subr.mxu0 0.0
    %228 = vmatpush1.msra.mxu0 0.0
    %229 = vmatprep.subr.mxu0 0.0
    %230 = vmatpush1.msra.mxu0 0.0
    %231 = vmatprep.subr.mxu0 0.0
    %232 = vmatpush1.msra.mxu0 0.0
    %233 = vmatprep.mubr.f32.mxu0 0.0
    %234 = vmatmul.mubr.f32.gmra.mrb[0].mxu0 %v78
    %v235 = vpop.f32.mrb[0].mxu0
    %v236 = vadd.f32 %v167, %v235
    %v237 = vpop.f32.mrb[0].mxu0
    %238 = vmatprep.mubr.f32.mxu0 0.0
    %239 = vmatmul.mubr.f32.gmra.mrb[0].mxu0 %v81
    %v240 = vpop.f32.mrb[0].mxu0
    %v241 = vadd.f32 %v167, %v240
    %v242 = vpop.f32.mrb[0].mxu0
    %243 = vdwg.mxu0
    %244 = vst [vmem:[#allocation9] sm:$0xff] %v236
    %245 = vst [vmem:[#allocation9 + $0x8] sm:$0xff] %v241
    // Predicated region
    $region34: #{tpu_custom_call.1} parent=1 // pred_check
      _
    $region35: #{tpu_custom_call.1} parent=1 // pred_check_branch
      %247 = sbr.rel (0) target = $region37
    $region36: #{tpu_custom_call.1} parent=1 // pred_region
      %s249 = ssub.s32 256, 256
      %250 = vsyncadd [#allocation4], %s249
      %s251 = sshll.u32 [#allocation8], 4
      %s252 = int_to_ptr.vmem [resolvable:$true] %s251
      %257 = dma.vmem_to_hbm [thread:$0]  %s252, 256, %s5, [#allocation4], 128, 128, 8
    $region37: #{tpu_custom_call.1} parent=1 // pred_fallthru
      _
    // Predicated region
    $region38: #{tpu_custom_call.1} parent=1 // pred_check
      _
    $region39: #{tpu_custom_call.1} parent=1 // pred_check_branch
      %259 = sbr.rel (0) target = $region41
    $region40: #{tpu_custom_call.1} parent=1 // pred_region
      %s261 = ssub.s32 256, 256
      %262 = vsyncadd [#allocation10], %s261
      %s263 = sshll.u32 [#allocation9], 4
      %s264 = int_to_ptr.vmem [resolvable:$true] %s263
      %269 = dma.vmem_to_hbm [thread:$0]  %s264, 256, %s6, [#allocation10], 128, 128, 8
    $region41: #{tpu_custom_call.1} parent=1 // pred_fallthru
      _
    // Predicated region
    $region42: #{tpu_custom_call.1} parent=1 // pred_check
      _
    $region43: #{tpu_custom_call.1} parent=1 // pred_check_branch
      %271 = sbr.rel (0) target = $region45
    $region44: #{tpu_custom_call.1} parent=1 // pred_region
      %272 = dma.done [#allocation4], 256
    $region45: #{tpu_custom_call.1} parent=1 // pred_fallthru
      _
    // Predicated region
    $region46: #{tpu_custom_call.1} parent=1 // pred_check
      _
    $region47: #{tpu_custom_call.1} parent=1 // pred_check_branch
      %274 = sbr.rel (0) target = $region49
    $region48: #{tpu_custom_call.1} parent=1 // pred_region
      %275 = dma.done [#allocation10], 256
    $region49: #{tpu_custom_call.1} parent=1 // pred_fallthru
      _
    %276 = vsyncpa [#allocation3], 1
    %277 = vsyncpa [#allocation6], 1
    %278 = vsyncpa [#allocation4], 1
    %279 = vsyncpa [#allocation10], 1

</llo_original>
